<compile_context>
chip_gen: v7x
topology: tpu7x:2x2x1
jax: 0.10.0
libtpu: 0.0.40
codegen_flags: <defaults>
</compile_context>

<pallas_src>
import jax
import jax.numpy as jnp
from jax.experimental import pallas as pl
from jax.experimental.pallas import tpu as pltpu

_D = 16                     # input_dim of the Linear layer
_LANES = 128                # vreg lane width
_GROUPS = _LANES // _D      # 8 original rows packed per lane-dense row
_TB_CAP = 8192              # packed rows per tile: 8192*128*4 B = 4 MiB per buffer
_MIN_GRID = 2               # give v7x's two TensorCores work when possible


def emotion_regressor_kernel(x_ref, sw_ref, b_ref, o_ref):
    # x_ref : (TB, 128) lane-dense tile (8 original rows per packed row), streamed
    # sw_ref: (128, 8)  block-diagonal weight, resident across the grid
    # b_ref : (1, 1)    scalar bias in SMEM
    # o_ref : (TB, 8)   packed outputs (one sigmoid per original row)
    z = jnp.dot(x_ref[...], sw_ref[...], preferred_element_type=jnp.float32)  # MXU
    z = z + b_ref[0, 0]                                                       # scalar bias
    o_ref[...] = jax.nn.sigmoid(z).astype(o_ref.dtype)                        # EUP


def _block_diag_weight(w):
    # w: [D, 1] -> S_w: [128, 8] with S_w[g*D + j, g] = w[j], zeros elsewhere.
    wd = w.reshape(1, _D, 1).astype(jnp.float32)
    eye = jnp.eye(_GROUPS, dtype=jnp.float32)                    # (8, 8)
    return (eye[:, None, :] * wd).reshape(_LANES, _GROUPS)       # (128, 8)


def _plan_tiles(batch):
    """Pick packed-row tile size TB and the padded packed-row count."""
    rows = -(-batch // _GROUPS)                       # packed rows needed
    tb = min(_TB_CAP, max(8, -(-rows // _MIN_GRID)))  # >=2 grid steps when possible
    tb = -(-tb // 8) * 8                              # sublane multiple of 8
    rows_pad = -(-rows // tb) * tb
    return tb, rows_pad


def emotion_regressor(x, w, b):
    """Sigmoid(x @ w + b).  x: [B, 16] f32, w: [16, 1] f32, b: [1] or [1,1] f32 -> [B, 1]."""
    batch, dim = x.shape
    assert dim == _D, f"expected input_dim={_D}, got {dim}"

    tb, rows_pad = _plan_tiles(batch)
    batch_pad = rows_pad * _GROUPS

    if batch_pad != batch:
        x = jnp.pad(x, ((0, batch_pad - batch), (0, 0)))
    x_packed = x.reshape(rows_pad, _LANES)            # free relayout: rows contiguous

    sw = _block_diag_weight(w)
    b_scalar = jnp.asarray(b, dtype=jnp.float32).reshape(1, 1)

    grid = (rows_pad // tb,)

    # Double-buffered x + out tiles (+1 MiB slack for the resident weight etc.).
    vmem_bytes = 2 * (tb * _LANES + tb * _GROUPS) * 4 + (1 << 20)
    vmem_limit = min(max(vmem_bytes, 4 << 20), 32 << 20)

    out_packed = pl.pallas_call(
        emotion_regressor_kernel,
        out_shape=jax.ShapeDtypeStruct((rows_pad, _GROUPS), jnp.float32),
        grid_spec=pltpu.PrefetchScalarGridSpec(
            num_scalar_prefetch=0,
            grid=grid,
            in_specs=[
                pl.BlockSpec((tb, _LANES), lambda i: (i, 0)),           # streamed x tiles
                pl.BlockSpec((_LANES, _GROUPS), lambda i: (0, 0)),      # resident weight
                pl.BlockSpec(memory_space=pltpu.MemorySpace.SMEM),      # scalar bias
            ],
            out_specs=pl.BlockSpec((tb, _GROUPS), lambda i: (i, 0)),
        ),
        compiler_params=pltpu.CompilerParams(
            dimension_semantics=("parallel",),    # shard batch across v7x's 2 TCs
            vmem_limit_bytes=vmem_limit,
        ),
    )(x_packed, sw, b_scalar)

    # (rows_pad, 8) -> (batch_pad, 1): element (r, g) is original row 8r+g.
    return out_packed.reshape(batch_pad, 1)[:batch]


def reference(x, w, b):
    return jax.nn.sigmoid(x @ w + jnp.asarray(b, jnp.float32).reshape(1, 1))


if __name__ == "__main__":
    input_dim = 16
    batch = 2

    key = jax.random.PRNGKey(0)
    kx, kw, kb = jax.random.split(key, 3)

    x = jax.random.normal(kx, (batch, input_dim), dtype=jnp.float32)
    # Mimic PyTorch nn.Linear default init scale ~ U(-1/sqrt(D), 1/sqrt(D)).
    bound = 1.0 / jnp.sqrt(jnp.float32(input_dim))
    w = jax.random.uniform(kw, (input_dim, 1), minval=-bound, maxval=bound,
                           dtype=jnp.float32)
    b = jax.random.uniform(kb, (1, 1), minval=-bound, maxval=bound,
                           dtype=jnp.float32)

    out = emotion_regressor(x, w, b)
    jax.block_until_ready(out)
    assert out.shape == (batch, 1)
    assert jnp.allclose(out, reference(x, w, b), atol=1e-5, rtol=1e-5)

    # Exercise the multi-step pipelined path (rows=512, TB=256, grid=(2,)).
    big_batch = 4096
    xb = jax.random.normal(kx, (big_batch, input_dim), dtype=jnp.float32)
    out_big = emotion_regressor(xb, w, b)
    jax.block_until_ready(out_big)
    assert out_big.shape == (big_batch, 1)
    assert jnp.allclose(out_big, reference(xb, w, b), atol=1e-5, rtol=1e-5)

    # Exercise the ragged-batch (pad + slice) path.
    ragged_batch = 1000
    xr = jax.random.normal(kb, (ragged_batch, input_dim), dtype=jnp.float32)
    out_r = emotion_regressor(xr, w, b)
    jax.block_until_ready(out_r)
    assert out_r.shape == (ragged_batch, 1)
    assert jnp.allclose(out_r, reference(xr, w, b), atol=1e-5, rtol=1e-5)

    print("KERNEL_OK")
</pallas_src>

<mosaic_0001>
module attributes {stable_mosaic.version = 11 : i64} {
  func.func @emotion_regressor_kernel(%arg0: i32, %arg1: memref<8x128xf32, #tpu.memory_space<vmem>>, %arg2: memref<128x8xf32, #tpu.memory_space<vmem>>, %arg3: memref<1x1xf32, #tpu.memory_space<smem>>, %arg4: memref<8x8xf32, #tpu.memory_space<vmem>>) attributes {dimension_semantics = [#tpu.dimension_semantics<parallel>], iteration_bounds = array<i64: 1>, scalar_prefetch = 0 : i64, scratch_operands = 0 : i64, tpu.core_type = #tpu.core_type<tc>, window_params = [{transform_indices = @transform_0, window_bounds = array<i64: 8, 128>}, {pipeline_mode = #tpu.pipeline_mode<synchronous>, transform_indices = @transform_1, window_bounds = array<i64: 128, 8>}, {transform_indices = @transform_2, window_bounds = array<i64: 1, 1>}, {transform_indices = @transform_3, window_bounds = array<i64: 8, 8>}]} {
    %c0 = arith.constant 0 : index
    %c0_0 = arith.constant 0 : index
    %0 = vector.load %arg1[%c0, %c0_0] : memref<8x128xf32, #tpu.memory_space<vmem>>, vector<8x128xf32>
    %c0_1 = arith.constant 0 : index
    %c0_2 = arith.constant 0 : index
    %1 = vector.load %arg2[%c0_1, %c0_2] : memref<128x8xf32, #tpu.memory_space<vmem>>, vector<128x8xf32>
    %cst = arith.constant dense<0.000000e+00> : vector<8x8xf32>
    %2 = tpu.matmul %0, %1, %cst {dimension_numbers = #tpu.dot_dimension_numbers<[1], [0], [0], [1], [0, 0, 1, 1], [], []>} : vector<8x128xf32>, vector<128x8xf32>, vector<8x8xf32> -> vector<8x8xf32>
    %c0_3 = arith.constant 0 : index
    %c0_4 = arith.constant 0 : index
    %3 = memref.load %arg3[%c0_3, %c0_4] : memref<1x1xf32, #tpu.memory_space<smem>>
    %4 = vector.broadcast %3 : f32 to vector<8x8xf32>
    %5 = arith.addf %2, %4 : vector<8x8xf32>
    %6 = arith.negf %5 : vector<8x8xf32>
    %7 = math.exp %6 : vector<8x8xf32>
    %cst_5 = arith.constant 1.000000e+00 : f32
    %8 = vector.broadcast %cst_5 : f32 to vector<8x8xf32>
    %9 = arith.addf %8, %7 : vector<8x8xf32>
    %10 = arith.divf %8, %9 : vector<8x8xf32>
    %c0_6 = arith.constant 0 : index
    %c0_7 = arith.constant 0 : index
    %11 = vector.load %arg4[%c0_6, %c0_7] : memref<8x8xf32, #tpu.memory_space<vmem>>, vector<8x8xf32>
    tpu.vector_store %arg4[%c0_6, %c0_7], %10 {strides = array<i32>} : memref<8x8xf32, #tpu.memory_space<vmem>>, vector<8x8xf32>,
    return
  }
  func.func @transform_0(%arg0: i32) -> (i32, i32) {
    %c0_i32 = arith.constant 0 : i32
    %c0_i32_0 = arith.constant 0 : i32
    return %arg0, %c0_i32 : i32, i32
  }
  func.func @transform_1(%arg0: i32) -> (i32, i32) {
    %c0_i32 = arith.constant 0 : i32
    %c0_i32_0 = arith.constant 0 : i32
    %c0_i32_1 = arith.constant 0 : i32
    return %c0_i32, %c0_i32_0 : i32, i32
  }
  func.func @transform_2(%arg0: i32) -> (i32, i32) {
    %c0_i32 = arith.constant 0 : i32
    %c0_i32_0 = arith.constant 0 : i32
    %c0_i32_1 = arith.constant 0 : i32
    return %c0_i32, %c0_i32_0 : i32, i32
  }
  func.func @transform_3(%arg0: i32) -> (i32, i32) {
    %c0_i32 = arith.constant 0 : i32
    %c0_i32_0 = arith.constant 0 : i32
    return %arg0, %c0_i32 : i32, i32
  }
}

</mosaic_0001>

<llo_original>
// kernel: tpu_custom_call.1
$region0: #{tpu_custom_call.1}
  #allocation0 [shape = 'u32[]', space=smem, size = 0x4, offset = 0x4, fixed_abs, tag = 'smem constant byte address 0x4 - core index']
  #allocation1 [shape = 'u32[144,128]{1,0:T(1,128)}', space=vmem, size = 0x12000, scoped, tag = 'internal scratch']
  #allocation2 [shape = 'f32[1,1]{1,0:T(1,128)S(6)}', space=smem, size = 0x200, scoped, tag = 'scoped memory for tpu_custom_call.1']
  %s0 = inlined_call_operand.vmem [shape: f32[8,128], index: 0, kind: input, shape index: {}]
  %s1 = inlined_call_operand.vmem [shape: f32[128,8], index: 1, kind: input, shape index: {}]
  %s2 = inlined_call_operand.<no memory space> [shape: f32[1,1], index: 2, kind: input, shape index: {}]
  %s3 = inlined_call_operand.hbm [shape: f32[8,8], index: 3, kind: output, shape index: {}]
  %s4 = sld [smem:[#allocation0]]
  $region22: #{tpu_custom_call.1} parent=0
    _
  %s6 = ssub.s32 1, %s4
  %s7 = scalar_select 0, %s6, %s4
  %8 = sst [smem:[#allocation2]] %s2
  $region1: #{tpu_custom_call.1} parent=0
    #allocation3 [shape = 'u8[4096]{0}', space=vmem, size = 0x1000, scoped, tag = 'output window, operand 0, single buffered']
    #allocation4 [shape = 's32[1]{0}', space=sflag, size = 0x4, scoped, tag = 'scoped memory for tpu_custom_call.1']
    %9 = vsyncpa [#allocation4], 0
    // Predicated region
    $region2: #{tpu_custom_call.1} parent=1 // pred_check
      _
    $region3: #{tpu_custom_call.1} parent=1 // pred_check_branch
      %11 = sbr.rel (0) target = $region5
    $region4: #{tpu_custom_call.1} parent=1 // pred_region
      _
    $region5: #{tpu_custom_call.1} parent=1 // pred_fallthru
      _
    // Predicated region
    $region6: #{tpu_custom_call.1} parent=1 // pred_check
      _
    $region7: #{tpu_custom_call.1} parent=1 // pred_check_branch
      %13 = sbr.rel (0) target = $region9
    $region8: #{tpu_custom_call.1} parent=1 // pred_region
      _
    $region9: #{tpu_custom_call.1} parent=1 // pred_fallthru
      _
    // Predicated region
    $region10: #{tpu_custom_call.1} parent=1 // pred_check
      _
    $region11: #{tpu_custom_call.1} parent=1 // pred_check_branch
      %15 = sbr.rel (0) target = $region13
    $region12: #{tpu_custom_call.1} parent=1 // pred_region
      _
    $region13: #{tpu_custom_call.1} parent=1 // pred_fallthru
      _
    %v16 = vld [vmem:[%s0] sm:$0xff]
    %v17 = vld [vmem:[%s1] sm:$0xff]
    %v18 = vld [vmem:[%s1 + $0x8] sm:$0xff]
    %v19 = vld [vmem:[%s1 + $0x10] sm:$0xff]
    %v20 = vld [vmem:[%s1 + $0x18] sm:$0xff]
    %v21 = vld [vmem:[%s1 + $0x20] sm:$0xff]
    %v22 = vld [vmem:[%s1 + $0x28] sm:$0xff]
    %v23 = vld [vmem:[%s1 + $0x30] sm:$0xff]
    %v24 = vld [vmem:[%s1 + $0x38] sm:$0xff]
    %v25 = vld [vmem:[%s1 + $0x40] sm:$0xff]
    %v26 = vld [vmem:[%s1 + $0x48] sm:$0xff]
    %v27 = vld [vmem:[%s1 + $0x50] sm:$0xff]
    %v28 = vld [vmem:[%s1 + $0x58] sm:$0xff]
    %v29 = vld [vmem:[%s1 + $0x60] sm:$0xff]
    %v30 = vld [vmem:[%s1 + $0x68] sm:$0xff]
    %v31 = vld [vmem:[%s1 + $0x70] sm:$0xff]
    %v32 = vld [vmem:[%s1 + $0x78] sm:$0xff]
    %s33 = sld [smem:[#allocation2]]
    %v34 = vstv %s33
    %35 = vmatprep.subr.mxu0 0.0
    %36 = vmatpush1.msra.mxu0 %v17
    %37 = vmatprep.subr.mxu0 0.0
    %38 = vmatpush1.msra.mxu0 %v18
    %39 = vmatprep.subr.mxu0 0.0
    %40 = vmatpush1.msra.mxu0 %v19
    %41 = vmatprep.subr.mxu0 0.0
    %42 = vmatpush1.msra.mxu0 %v20
    %43 = vmatprep.subr.mxu0 0.0
    %44 = vmatpush1.msra.mxu0 %v21
    %45 = vmatprep.subr.mxu0 0.0
    %46 = vmatpush1.msra.mxu0 %v22
    %47 = vmatprep.subr.mxu0 0.0
    %48 = vmatpush1.msra.mxu0 %v23
    %49 = vmatprep.subr.mxu0 0.0
    %50 = vmatpush1.msra.mxu0 %v24
    %51 = vmatprep.subr.mxu0 0.0
    %52 = vmatpush1.msra.mxu0 %v25
    %53 = vmatprep.subr.mxu0 0.0
    %54 = vmatpush1.msra.mxu0 %v26
    %55 = vmatprep.subr.mxu0 0.0
    %56 = vmatpush1.msra.mxu0 %v27
    %57 = vmatprep.subr.mxu0 0.0
    %58 = vmatpush1.msra.mxu0 %v28
    %59 = vmatprep.subr.mxu0 0.0
    %60 = vmatpush1.msra.mxu0 %v29
    %61 = vmatprep.subr.mxu0 0.0
    %62 = vmatpush1.msra.mxu0 %v30
    %63 = vmatprep.subr.mxu0 0.0
    %64 = vmatpush1.msra.mxu0 %v31
    %65 = vmatprep.subr.mxu0 0.0
    %66 = vmatpush1.msra.mxu0 %v32
    %67 = vmatprep.subr.mxu0 0.0
    %68 = vmatpush1.msra.mxu0 0.0
    %69 = vmatprep.subr.mxu0 0.0
    %70 = vmatpush1.msra.mxu0 0.0
    %71 = vmatprep.subr.mxu0 0.0
    %72 = vmatpush1.msra.mxu0 0.0
    %73 = vmatprep.subr.mxu0 0.0
    %74 = vmatpush1.msra.mxu0 0.0
    %75 = vmatprep.subr.mxu0 0.0
    %76 = vmatpush1.msra.mxu0 0.0
    %77 = vmatprep.subr.mxu0 0.0
    %78 = vmatpush1.msra.mxu0 0.0
    %79 = vmatprep.subr.mxu0 0.0
    %80 = vmatpush1.msra.mxu0 0.0
    %81 = vmatprep.subr.mxu0 0.0
    %82 = vmatpush1.msra.mxu0 0.0
    %83 = vmatprep.subr.mxu0 0.0
    %84 = vmatpush1.msra.mxu0 0.0
    %85 = vmatprep.subr.mxu0 0.0
    %86 = vmatpush1.msra.mxu0 0.0
    %87 = vmatprep.subr.mxu0 0.0
    %88 = vmatpush1.msra.mxu0 0.0
    %89 = vmatprep.subr.mxu0 0.0
    %90 = vmatpush1.msra.mxu0 0.0
    %91 = vmatprep.subr.mxu0 0.0
    %92 = vmatpush1.msra.mxu0 0.0
    %93 = vmatprep.subr.mxu0 0.0
    %94 = vmatpush1.msra.mxu0 0.0
    %95 = vmatprep.subr.mxu0 0.0
    %96 = vmatpush1.msra.mxu0 0.0
    %97 = vmatprep.subr.mxu0 0.0
    %98 = vmatpush1.msra.mxu0 0.0
    %99 = vmatprep.mubr.f32.mxu0 0.0
    %100 = vmatmul.mubr.f32.gmra.mrb[0].mxu0 %v16
    %v101 = vpop.f32.mrb[0].mxu0
    %v102 = vadd.f32 %v34, %v101
    %v103 = vpop.f32.mrb[0].mxu0
    %104 = vdwg.mxu0
    %v105 = vxor.u32 %v102, 2147483648
    %v106 = vmul.f32 %v105, 1.442695
    %v107 = vpow.pop %v106
    %v108 = vadd.f32 %v107, 1.0
    %v109 = vrcp.pop %v108
    %v110 = vmul.f32 1.0, %v109
    %vm111 = vcmask 64512
    %112 = vst.msk [vmem:[#allocation3] sm:$0xff] %vm111, %v110
    // Predicated region
    $region14: #{tpu_custom_call.1} parent=1 // pred_check
      _
    $region15: #{tpu_custom_call.1} parent=1 // pred_check_branch
      %114 = sbr.rel (0) target = $region17
    $region16: #{tpu_custom_call.1} parent=1 // pred_region
      %s116 = ssub.s32 128, 128
      %117 = vsyncadd [#allocation4], %s116
      %s119 = sshll.u32 [#allocation3], 4
      %s120 = int_to_ptr.vmem [resolvable:$true] %s119
      %122 = dma.vmem_to_hbm [thread:$0]  %s120, 128, %s3, [#allocation4]
    $region17: #{tpu_custom_call.1} parent=1 // pred_fallthru
      _
    // Predicated region
    $region18: #{tpu_custom_call.1} parent=1 // pred_check
      _
    $region19: #{tpu_custom_call.1} parent=1 // pred_check_branch
      %124 = sbr.rel (0) target = $region21
    $region20: #{tpu_custom_call.1} parent=1 // pred_region
      %125 = dma.done [#allocation4], 128
    $region21: #{tpu_custom_call.1} parent=1 // pred_fallthru
      _
    %126 = vsyncpa [#allocation4], 1

</llo_original>
